<compile_context>
chip_gen: v5e
topology: v5e:2x2
jax: 0.10.0
libtpu: 0.0.40
codegen_flags: <defaults>
</compile_context>

<pallas_src>
import jax
import jax.numpy as jnp
from jax.experimental import pallas as pl
from jax.experimental.pallas import tpu as pltpu


def _ru(n, m):
    """Round n up to a multiple of m (Python ints, trace-time)."""
    return ((n + m - 1) // m) * m


# ----------------------------- Pallas kernel ------------------------------- #

def tigon_mlp_kernel(x_ref, w1_ref, w2_ref, w3_ref, wo_ref, b_ref, o_ref):
    """Fused 4-layer MLP forward for one (batch_tile, :) slab.

    x_ref  : (Bt, d_in)   natural layout (batch on sublanes), f32
    wX_ref : (in, out)    bf16, pre-transposed from PyTorch (out, in)
    b_ref  : (1, P)       f32 biases packed at 128-lane-aligned offsets
    o_ref  : (Bt, d_out)  natural-layout output slab

    Invariant (ragged-batch safety): no op reduces across the batch dimension,
    so garbage rows of a partial block only affect garbage output rows, which
    Pallas masks on writeback.
    """
    f32, bf16 = jnp.float32, jnp.bfloat16
    h0 = w1_ref.shape[1]
    h1 = w2_ref.shape[1]
    h2 = w3_ref.shape[1]
    do = wo_ref.shape[1]

    # Packed-bias offsets (lane-tile aligned; static at trace time).
    o0 = 0
    o1 = o0 + _ru(h0, 128)
    o2 = o1 + _ru(h1, 128)
    o3 = o2 + _ru(h2, 128)
    b1 = b_ref[:, o0:o0 + h0]
    b2 = b_ref[:, o1:o1 + h1]
    b3 = b_ref[:, o2:o2 + h2]
    bo = b_ref[:, o3:o3 + do]

    x = x_ref[...].astype(bf16)

    # hyper_net1.net[0..2]: Linear + Tanh (bf16 MXU operands, f32 accumulation)
    h = jnp.tanh(jnp.dot(x, w1_ref[...], preferred_element_type=f32) + b1)
    h = jnp.tanh(jnp.dot(h.astype(bf16), w2_ref[...],
                         preferred_element_type=f32) + b2)
    h = jnp.tanh(jnp.dot(h.astype(bf16), w3_ref[...],
                         preferred_element_type=f32) + b3)
    # hyper_net1.out: Linear (no activation)
    y = jnp.dot(h.astype(bf16), wo_ref[...], preferred_element_type=f32) + bo

    o_ref[...] = y.astype(o_ref.dtype)


# ----------------------- one-time parameter preparation -------------------- #

def prepare_tigon_params(params):
    """One-time prep (do NOT call per forward step).

    params: list of (w, b) in PyTorch layout, w: (out, in), b: (out, 1).
    Returns:
      wT          : tuple of bf16 (in, out) weights (cached MXU operands)
      bias_packed : (1, P) f32, each bias padded to a 128-lane boundary
    Caching this removes all per-call casts / transposes / concats.
    """
    wT = tuple(jnp.asarray(w).T.astype(jnp.bfloat16) for w, _ in params)
    chunks = []
    for _, b in params:
        b = jnp.asarray(b, jnp.float32).reshape(-1)
        chunks.append(jnp.pad(b, (0, _ru(b.shape[0], 128) - b.shape[0])))
    bias_packed = jnp.concatenate(chunks).reshape(1, -1)
    return wT, bias_packed


def _num_tensorcores():
    """2 TensorCores per chip on v7x, 1 on v5e/v6e (best-effort detection)."""
    try:
        dev = jax.devices()[0]
        if dev.platform != "tpu":
            return 1
        return 2 if "v7" in dev.device_kind.lower() else 1
    except Exception:
        return 1


# ------------------------------- wrapper ----------------------------------- #

def tigon_wrapper_forward(x, prepared, *, batch_tile=None):
    """TIGONwrapper.forward: x (B, in_out_dim+1) -> (B, in_out_dim).

    `prepared` comes from prepare_tigon_params.  The wrapper issues exactly one
    pallas_call — no transpose / pad / slice / cast glue around it.
    """
    # TODO(synk): when driven by TIGON's ODE integrator, fuse several substeps
    # into one pallas_call (in-kernel fori_loop with weights VMEM-resident) to
    # amortize launch + weight-DMA cost; that fusion lives at the call site.
    wT, bias_packed = prepared
    B, d_in = x.shape
    assert d_in == wT[0].shape[0], "input feature dim mismatch"
    d_out = wT[-1].shape[1]

    n_cores = _num_tensorcores()
    if batch_tile is None:
        # One big tile per TensorCore (grid=1 on 1-TC chips).  Batch is on the
        # sublane axis -> only multiple-of-8 alignment needed, so padding waste
        # for ragged B is at most 7 rows.
        per_core = pl.cdiv(B, n_cores)
        batch_tile = max(8, min(_ru(per_core, 8), 1024))
    else:
        batch_tile = max(8, _ru(batch_tile, 8))
    grid = (pl.cdiv(B, batch_tile),)

    def full_block(a):  # whole array, same block every grid step (DMA'd once)
        return pl.BlockSpec(a.shape, lambda i: (0, 0))

    in_specs = [pl.BlockSpec((batch_tile, d_in), lambda i: (i, 0))]
    in_specs += [full_block(w) for w in wT]
    in_specs += [full_block(bias_packed)]
    out_spec = pl.BlockSpec((batch_tile, d_out), lambda i: (i, 0))

    # v7x: split the batch axis across both TensorCores (even split guaranteed
    # by the tile heuristic); elsewhere plain PARALLEL (grid is 1 step anyway).
    if n_cores > 1 and grid[0] % n_cores == 0:
        semantics_candidates = (pltpu.CORE_PARALLEL, pltpu.PARALLEL)
    else:
        semantics_candidates = (pltpu.PARALLEL,)

    last_err = None
    for sem in semantics_candidates:
        try:
            return pl.pallas_call(
                tigon_mlp_kernel,
                out_shape=jax.ShapeDtypeStruct((B, d_out), x.dtype),
                grid=grid,
                in_specs=in_specs,
                out_specs=out_spec,
                compiler_params=pltpu.CompilerParams(
                    dimension_semantics=(sem,)),
            )(x, *wT, bias_packed)
        except Exception as e:  # CORE_PARALLEL unsupported -> fall back
            last_err = e
    raise last_err


# -------------------------- parameter construction ------------------------- #

def init_linear(key, fan_in, fan_out, dtype=jnp.float32):
    """PyTorch nn.Linear default init U(-1/sqrt(fan_in), +1/sqrt(fan_in)).

    Stored in PyTorch layout: weight (fan_out, fan_in), bias (fan_out, 1).
    """
    kw, kb = jax.random.split(key)
    bound = 1.0 / (fan_in ** 0.5)
    w = jax.random.uniform(kw, (fan_out, fan_in), dtype, -bound, bound)
    b = jax.random.uniform(kb, (fan_out, 1), dtype, -bound, bound)
    return w, b


def build_tigon_params(key, in_out_dim, hidden_dims):
    """TIGON hyper_net1: layer widths [in_out_dim+1] + hidden_dims + [in_out_dim]."""
    dims = [in_out_dim + 1] + list(hidden_dims) + [in_out_dim]
    keys = jax.random.split(key, len(dims) - 1)
    return [init_linear(keys[i], dims[i], dims[i + 1]) for i in range(len(dims) - 1)]


# ------------------------------ references --------------------------------- #

def reference_forward_f32(x, params):
    """Pure-f32 JAX reference of TIGONwrapper.forward (original-module math)."""
    h = x
    for (w, b) in params[:-1]:
        h = jnp.tanh(h @ w.T + b.T)
    wo, bo = params[-1]
    return h @ wo.T + bo.T


def reference_forward_bf16(x, params):
    """Same arithmetic as the kernel: bf16 MXU operands, f32 accumulation."""
    bf = jnp.bfloat16
    h = x
    for (w, b) in params[:-1]:
        h = jnp.tanh(jnp.dot(h.astype(bf), w.T.astype(bf),
                             preferred_element_type=jnp.float32) + b.T)
    wo, bo = params[-1]
    return jnp.dot(h.astype(bf), wo.T.astype(bf),
                   preferred_element_type=jnp.float32) + bo.T


# ---------------------------------- main ----------------------------------- #

if __name__ == "__main__":
    key = jax.random.PRNGKey(0)
    k_param, k_x = jax.random.split(key)

    in_out_dim = 10              # TIGON velocity / gene-state dimension
    hidden_dims = (64, 64, 64)   # hyper_net1 hidden widths
    batch = 256                  # cells; input is [state, t] -> 11 features

    params = build_tigon_params(k_param, in_out_dim, hidden_dims)
    prepared = prepare_tigon_params(params)   # one-time: transpose+bf16+bias-pack
    x = jax.random.normal(k_x, (batch, in_out_dim + 1), dtype=jnp.float32)

    y = jax.block_until_ready(tigon_wrapper_forward(x, prepared))
    assert y.shape == (batch, in_out_dim)

    y_bf = reference_forward_bf16(x, params)
    y_f32 = reference_forward_f32(x, params)
    assert jnp.allclose(y, y_bf, atol=1e-3, rtol=1e-3), \
        "mismatch vs bf16-matched reference"
    assert jnp.allclose(y, y_f32, atol=5e-2, rtol=5e-2), \
        "mismatch vs f32 reference (mixed-precision drift too large)"

    # Ragged batch (not a multiple of 128): exercises partial-block masking.
    x2 = jax.random.normal(jax.random.PRNGKey(1), (200, in_out_dim + 1),
                           dtype=jnp.float32)
    y2 = jax.block_until_ready(tigon_wrapper_forward(x2, prepared))
    assert y2.shape == (200, in_out_dim)
    assert jnp.allclose(y2, reference_forward_bf16(x2, params),
                        atol=1e-3, rtol=1e-3), "ragged-batch mismatch"

    # Very ragged / tiny batch (forces a partial block).
    x3 = jax.random.normal(jax.random.PRNGKey(2), (37, in_out_dim + 1),
                           dtype=jnp.float32)
    y3 = jax.block_until_ready(tigon_wrapper_forward(x3, prepared))
    assert y3.shape == (37, in_out_dim)
    assert jnp.allclose(y3, reference_forward_bf16(x3, params),
                        atol=1e-3, rtol=1e-3), "partial-block mismatch"

    print("KERNEL_OK")
</pallas_src>

<mosaic_0001>
module attributes {stable_mosaic.version = 11 : i64} {
  func.func @tigon_mlp_kernel(%arg0: i32, %arg1: memref<256x11xf32, #tpu.memory_space<vmem>>, %arg2: memref<11x64xbf16, #tpu.memory_space<vmem>>, %arg3: memref<64x64xbf16, #tpu.memory_space<vmem>>, %arg4: memref<64x64xbf16, #tpu.memory_space<vmem>>, %arg5: memref<64x10xbf16, #tpu.memory_space<vmem>>, %arg6: memref<1x512xf32, #tpu.memory_space<vmem>>, %arg7: memref<256x10xf32, #tpu.memory_space<vmem>>) attributes {dimension_semantics = [#tpu.dimension_semantics<parallel>], iteration_bounds = array<i64: 1>, scalar_prefetch = 0 : i64, scratch_operands = 0 : i64, tpu.core_type = #tpu.core_type<tc>, window_params = [{transform_indices = @transform_0, window_bounds = array<i64: 256, 11>}, {pipeline_mode = #tpu.pipeline_mode<synchronous>, transform_indices = @transform_1, window_bounds = array<i64: 11, 64>}, {pipeline_mode = #tpu.pipeline_mode<synchronous>, transform_indices = @transform_2, window_bounds = array<i64: 64, 64>}, {pipeline_mode = #tpu.pipeline_mode<synchronous>, transform_indices = @transform_3, window_bounds = array<i64: 64, 64>}, {pipeline_mode = #tpu.pipeline_mode<synchronous>, transform_indices = @transform_4, window_bounds = array<i64: 64, 10>}, {pipeline_mode = #tpu.pipeline_mode<synchronous>, transform_indices = @transform_5, window_bounds = array<i64: 1, 512>}, {transform_indices = @transform_6, window_bounds = array<i64: 256, 10>}]} {
    %c0 = arith.constant 0 : index
    %c0_0 = arith.constant 0 : index
    %0 = vector.load %arg6[%c0, %c0_0] : memref<1x512xf32, #tpu.memory_space<vmem>>, vector<1x64xf32>
    %c0_1 = arith.constant 0 : index
    %c128 = arith.constant 128 : index
    %1 = vector.load %arg6[%c0_1, %c128] : memref<1x512xf32, #tpu.memory_space<vmem>>, vector<1x64xf32>
    %c0_2 = arith.constant 0 : index
    %c256 = arith.constant 256 : index
    %2 = vector.load %arg6[%c0_2, %c256] : memref<1x512xf32, #tpu.memory_space<vmem>>, vector<1x64xf32>
    %c0_3 = arith.constant 0 : index
    %c384 = arith.constant 384 : index
    %3 = vector.load %arg6[%c0_3, %c384] : memref<1x512xf32, #tpu.memory_space<vmem>>, vector<1x10xf32>
    %c0_4 = arith.constant 0 : index
    %c0_5 = arith.constant 0 : index
    %4 = vector.load %arg1[%c0_4, %c0_5] : memref<256x11xf32, #tpu.memory_space<vmem>>, vector<256x11xf32>
    %5 = arith.truncf %4 : vector<256x11xf32> to vector<256x11xbf16>
    %c0_6 = arith.constant 0 : index
    %c0_7 = arith.constant 0 : index
    %6 = vector.load %arg2[%c0_6, %c0_7] : memref<11x64xbf16, #tpu.memory_space<vmem>>, vector<11x64xbf16>
    %cst = arith.constant dense<0.000000e+00> : vector<256x64xf32>
    %7 = tpu.matmul %5, %6, %cst {dimension_numbers = #tpu.dot_dimension_numbers<[1], [0], [0], [1], [0, 0, 1, 1], [], []>} : vector<256x11xbf16>, vector<11x64xbf16>, vector<256x64xf32> -> vector<256x64xf32>
    %8 = vector.broadcast %0 : vector<1x64xf32> to vector<256x64xf32>
    %9 = arith.addf %7, %8 : vector<256x64xf32>
    %10 = math.tanh %9 : vector<256x64xf32>
    %11 = arith.truncf %10 : vector<256x64xf32> to vector<256x64xbf16>
    %c0_8 = arith.constant 0 : index
    %c0_9 = arith.constant 0 : index
    %12 = vector.load %arg3[%c0_8, %c0_9] : memref<64x64xbf16, #tpu.memory_space<vmem>>, vector<64x64xbf16>
    %cst_10 = arith.constant dense<0.000000e+00> : vector<256x64xf32>
    %13 = tpu.matmul %11, %12, %cst_10 {dimension_numbers = #tpu.dot_dimension_numbers<[1], [0], [0], [1], [0, 0, 1, 1], [], []>} : vector<256x64xbf16>, vector<64x64xbf16>, vector<256x64xf32> -> vector<256x64xf32>
    %14 = vector.broadcast %1 : vector<1x64xf32> to vector<256x64xf32>
    %15 = arith.addf %13, %14 : vector<256x64xf32>
    %16 = math.tanh %15 : vector<256x64xf32>
    %17 = arith.truncf %16 : vector<256x64xf32> to vector<256x64xbf16>
    %c0_11 = arith.constant 0 : index
    %c0_12 = arith.constant 0 : index
    %18 = vector.load %arg4[%c0_11, %c0_12] : memref<64x64xbf16, #tpu.memory_space<vmem>>, vector<64x64xbf16>
    %cst_13 = arith.constant dense<0.000000e+00> : vector<256x64xf32>
    %19 = tpu.matmul %17, %18, %cst_13 {dimension_numbers = #tpu.dot_dimension_numbers<[1], [0], [0], [1], [0, 0, 1, 1], [], []>} : vector<256x64xbf16>, vector<64x64xbf16>, vector<256x64xf32> -> vector<256x64xf32>
    %20 = vector.broadcast %2 : vector<1x64xf32> to vector<256x64xf32>
    %21 = arith.addf %19, %20 : vector<256x64xf32>
    %22 = math.tanh %21 : vector<256x64xf32>
    %23 = arith.truncf %22 : vector<256x64xf32> to vector<256x64xbf16>
    %c0_14 = arith.constant 0 : index
    %c0_15 = arith.constant 0 : index
    %24 = vector.load %arg5[%c0_14, %c0_15] : memref<64x10xbf16, #tpu.memory_space<vmem>>, vector<64x10xbf16>
    %cst_16 = arith.constant dense<0.000000e+00> : vector<256x10xf32>
    %25 = tpu.matmul %23, %24, %cst_16 {dimension_numbers = #tpu.dot_dimension_numbers<[1], [0], [0], [1], [0, 0, 1, 1], [], []>} : vector<256x64xbf16>, vector<64x10xbf16>, vector<256x10xf32> -> vector<256x10xf32>
    %26 = vector.broadcast %3 : vector<1x10xf32> to vector<256x10xf32>
    %27 = arith.addf %25, %26 : vector<256x10xf32>
    %c0_17 = arith.constant 0 : index
    %c0_18 = arith.constant 0 : index
    %28 = vector.load %arg7[%c0_17, %c0_18] : memref<256x10xf32, #tpu.memory_space<vmem>>, vector<256x10xf32>
    tpu.vector_store %arg7[%c0_17, %c0_18], %27 {strides = array<i32>} : memref<256x10xf32, #tpu.memory_space<vmem>>, vector<256x10xf32>,
    return
  }
  func.func @transform_0(%arg0: i32) -> (i32, i32) {
    %c0_i32 = arith.constant 0 : i32
    %c0_i32_0 = arith.constant 0 : i32
    return %arg0, %c0_i32 : i32, i32
  }
  func.func @transform_1(%arg0: i32) -> (i32, i32) {
    %c0_i32 = arith.constant 0 : i32
    %c0_i32_0 = arith.constant 0 : i32
    %c0_i32_1 = arith.constant 0 : i32
    return %c0_i32, %c0_i32_0 : i32, i32
  }
  func.func @transform_2(%arg0: i32) -> (i32, i32) {
    %c0_i32 = arith.constant 0 : i32
    %c0_i32_0 = arith.constant 0 : i32
    %c0_i32_1 = arith.constant 0 : i32
    return %c0_i32, %c0_i32_0 : i32, i32
  }
  func.func @transform_3(%arg0: i32) -> (i32, i32) {
    %c0_i32 = arith.constant 0 : i32
    %c0_i32_0 = arith.constant 0 : i32
    %c0_i32_1 = arith.constant 0 : i32
    return %c0_i32, %c0_i32_0 : i32, i32
  }
  func.func @transform_4(%arg0: i32) -> (i32, i32) {
    %c0_i32 = arith.constant 0 : i32
    %c0_i32_0 = arith.constant 0 : i32
    %c0_i32_1 = arith.constant 0 : i32
    return %c0_i32, %c0_i32_0 : i32, i32
  }
  func.func @transform_5(%arg0: i32) -> (i32, i32) {
    %c0_i32 = arith.constant 0 : i32
    %c0_i32_0 = arith.constant 0 : i32
    %c0_i32_1 = arith.constant 0 : i32
    return %c0_i32, %c0_i32_0 : i32, i32
  }
  func.func @transform_6(%arg0: i32) -> (i32, i32) {
    %c0_i32 = arith.constant 0 : i32
    %c0_i32_0 = arith.constant 0 : i32
    return %arg0, %c0_i32 : i32, i32
  }
}

</mosaic_0001>

<llo_original>
// kernel: tpu_custom_call.1
$region0: #{tpu_custom_call.1}
  #allocation0 [shape = 'u32[]', space=smem, size = 0x4, offset = 0x4, fixed_abs, tag = 'smem constant byte address 0x4 - core index']
  #allocation1 [shape = 'u32[72,128]{1,0:T(1,128)}', space=vmem, size = 0x9000, scoped, tag = 'internal scratch']
  %s0 = inlined_call_operand.vmem [shape: f32[256,11], index: 0, kind: input, shape index: {}]
  %s1 = inlined_call_operand.vmem [shape: bf16[11,64], index: 1, kind: input, shape index: {}]
  %s2 = inlined_call_operand.vmem [shape: bf16[64,64], index: 2, kind: input, shape index: {}]
  %s3 = inlined_call_operand.vmem [shape: bf16[64,64], index: 3, kind: input, shape index: {}]
  %s4 = inlined_call_operand.vmem [shape: bf16[64,10], index: 4, kind: input, shape index: {}]
  %s5 = inlined_call_operand.vmem [shape: f32[1,512], index: 5, kind: input, shape index: {}]
  %s6 = inlined_call_operand.vmem [shape: f32[256,10], index: 6, kind: output, shape index: {}]
  %s7 = sld [smem:[#allocation0]]
  $region34: #{tpu_custom_call.1} parent=0
    _
  %s9 = ssub.s32 1, %s7
  %s10 = scalar_select 0, %s9, %s7
  // Predicated region
  $region2: #{tpu_custom_call.1} parent=0 // pred_check
    _
  $region3: #{tpu_custom_call.1} parent=0 // pred_check_branch
    %12 = sbr.rel (0) target = $region5
  $region4: #{tpu_custom_call.1} parent=0 // pred_region
    _
  $region5: #{tpu_custom_call.1} parent=0 // pred_fallthru
    _
  // Predicated region
  $region6: #{tpu_custom_call.1} parent=0 // pred_check
    _
  $region7: #{tpu_custom_call.1} parent=0 // pred_check_branch
    %14 = sbr.rel (0) target = $region9
  $region8: #{tpu_custom_call.1} parent=0 // pred_region
    _
  $region9: #{tpu_custom_call.1} parent=0 // pred_fallthru
    _
  // Predicated region
  $region10: #{tpu_custom_call.1} parent=0 // pred_check
    _
  $region11: #{tpu_custom_call.1} parent=0 // pred_check_branch
    %16 = sbr.rel (0) target = $region13
  $region12: #{tpu_custom_call.1} parent=0 // pred_region
    _
  $region13: #{tpu_custom_call.1} parent=0 // pred_fallthru
    _
  // Predicated region
  $region14: #{tpu_custom_call.1} parent=0 // pred_check
    _
  $region15: #{tpu_custom_call.1} parent=0 // pred_check_branch
    %18 = sbr.rel (0) target = $region17
  $region16: #{tpu_custom_call.1} parent=0 // pred_region
    _
  $region17: #{tpu_custom_call.1} parent=0 // pred_fallthru
    _
  // Predicated region
  $region18: #{tpu_custom_call.1} parent=0 // pred_check
    _
  $region19: #{tpu_custom_call.1} parent=0 // pred_check_branch
    %20 = sbr.rel (0) target = $region21
  $region20: #{tpu_custom_call.1} parent=0 // pred_region
    _
  $region21: #{tpu_custom_call.1} parent=0 // pred_fallthru
    _
  // Predicated region
  $region22: #{tpu_custom_call.1} parent=0 // pred_check
    _
  $region23: #{tpu_custom_call.1} parent=0 // pred_check_branch
    %22 = sbr.rel (0) target = $region25
  $region24: #{tpu_custom_call.1} parent=0 // pred_region
    _
  $region25: #{tpu_custom_call.1} parent=0 // pred_fallthru
    _
  %v24 = vld [vmem:[%s5] sm:$0x1]
  %v25 = vld [vmem:[%s5 + $0x1] sm:$0x1]
  %v26 = vld [vmem:[%s5 + $0x2] sm:$0x1]
  %v27 = vld [vmem:[%s5 + $0x3] sm:$0x1]
  %v28 = vld [vmem:[%s0] sm:$0xff]
  %v29 = vld [vmem:[%s0 + $0x8] sm:$0xff]
  %v30 = vld [vmem:[%s0 + $0x10] sm:$0xff]
  %v31 = vld [vmem:[%s0 + $0x18] sm:$0xff]
  %v32 = vld [vmem:[%s0 + $0x20] sm:$0xff]
  %v33 = vld [vmem:[%s0 + $0x28] sm:$0xff]
  %v34 = vld [vmem:[%s0 + $0x30] sm:$0xff]
  %v35 = vld [vmem:[%s0 + $0x38] sm:$0xff]
  %v36 = vld [vmem:[%s0 + $0x40] sm:$0xff]
  %v37 = vld [vmem:[%s0 + $0x48] sm:$0xff]
  %v38 = vld [vmem:[%s0 + $0x50] sm:$0xff]
  %v39 = vld [vmem:[%s0 + $0x58] sm:$0xff]
  %v40 = vld [vmem:[%s0 + $0x60] sm:$0xff]
  %v41 = vld [vmem:[%s0 + $0x68] sm:$0xff]
  %v42 = vld [vmem:[%s0 + $0x70] sm:$0xff]
  %v43 = vld [vmem:[%s0 + $0x78] sm:$0xff]
  %v44 = vld [vmem:[%s0 + $0x80] sm:$0xff]
  %v45 = vld [vmem:[%s0 + $0x88] sm:$0xff]
  %v46 = vld [vmem:[%s0 + $0x90] sm:$0xff]
  %v47 = vld [vmem:[%s0 + $0x98] sm:$0xff]
  %v48 = vld [vmem:[%s0 + $0xa0] sm:$0xff]
  %v49 = vld [vmem:[%s0 + $0xa8] sm:$0xff]
  %v50 = vld [vmem:[%s0 + $0xb0] sm:$0xff]
  %v51 = vld [vmem:[%s0 + $0xb8] sm:$0xff]
  %v52 = vld [vmem:[%s0 + $0xc0] sm:$0xff]
  %v53 = vld [vmem:[%s0 + $0xc8] sm:$0xff]
  %v54 = vld [vmem:[%s0 + $0xd0] sm:$0xff]
  %v55 = vld [vmem:[%s0 + $0xd8] sm:$0xff]
  %v56 = vld [vmem:[%s0 + $0xe0] sm:$0xff]
  %v57 = vld [vmem:[%s0 + $0xe8] sm:$0xff]
  %v58 = vld [vmem:[%s0 + $0xf0] sm:$0xff]
  %v59 = vld [vmem:[%s0 + $0xf8] sm:$0xff]
  %v60 = vpack.c.bf16 %v29, %v28
  %v61 = vpack.c.bf16 %v31, %v30
  %v62 = vpack.c.bf16 %v33, %v32
  %v63 = vpack.c.bf16 %v35, %v34
  %v64 = vpack.c.bf16 %v37, %v36
  %v65 = vpack.c.bf16 %v39, %v38
  %v66 = vpack.c.bf16 %v41, %v40
  %v67 = vpack.c.bf16 %v43, %v42
  %v68 = vpack.c.bf16 %v45, %v44
  %v69 = vpack.c.bf16 %v47, %v46
  %v70 = vpack.c.bf16 %v49, %v48
  %v71 = vpack.c.bf16 %v51, %v50
  %v72 = vpack.c.bf16 %v53, %v52
  %v73 = vpack.c.bf16 %v55, %v54
  %v74 = vpack.c.bf16 %v57, %v56
  %v75 = vpack.c.bf16 %v59, %v58
  %v76 = vld [vmem:[%s1] sm:$0xf]
  %v77 = vld [vmem:[%s1 + $0x4] sm:$0x3]
  %v79 = vperm.slane %v24, 0
  %v83 = vunpack.c.l.b16 %v76
  %v84 = vunpack.c.l.b16 %v77
  %v85 = vpack.c.b16 %v84, %v83
  %vm86 = vcmask 89088
  %v88 = vsel %vm86, %v60, 0
  %v91 = vsel %vm86, %v61, 0
  %v94 = vsel %vm86, %v62, 0
  %v97 = vsel %vm86, %v63, 0
  %v100 = vsel %vm86, %v64, 0
  %v103 = vsel %vm86, %v65, 0
  %v106 = vsel %vm86, %v66, 0
  %v109 = vsel %vm86, %v67, 0
  %v112 = vsel %vm86, %v68, 0
  %v115 = vsel %vm86, %v69, 0
  %v118 = vsel %vm86, %v70, 0
  %v121 = vsel %vm86, %v71, 0
  %v124 = vsel %vm86, %v72, 0
  %v127 = vsel %vm86, %v73, 0
  %v130 = vsel %vm86, %v74, 0
  %v133 = vsel %vm86, %v75, 0
  %vm135 = vcmask 1044480
  %vm136 = vcmask 1045504
  %v137 = vsel %vm135, 4294967295, 65535
  %v138 = vsel %vm136, %v137, 0
  %v140 = vand.u32 %v85, %v138
  %142 = vmatpush.bf16.msra.mxu0 0
  %143 = vmatpush.bf16.msra.mxu0 0
  %144 = vmatpush.bf16.msra.mxu0 0
  %145 = vmatpush.bf16.msra.mxu0 0
  %146 = vmatpush.bf16.msra.mxu0 0
  %147 = vmatpush.bf16.msra.mxu0 0
  %148 = vmatpush.bf16.msra.mxu0 0
  %149 = vmatpush.bf16.msra.mxu0 %v140
  %150 = vmatmul.bf16.gmra.mxu0 %v88
  %v151 = vpop.f32.mrf.mxu0
  %v152 = vadd.f32 %v79, %v151
  %v153 = vpop.f32.mrf.mxu0
  %v154 = vadd.f32 %v79, %v153
  %155 = vmatmul.bf16.gmra.mxu0 %v91
  %v156 = vpop.f32.mrf.mxu0
  %v157 = vadd.f32 %v79, %v156
  %v158 = vpop.f32.mrf.mxu0
  %v159 = vadd.f32 %v79, %v158
  %160 = vmatmul.bf16.gmra.mxu0 %v94
  %v161 = vpop.f32.mrf.mxu0
  %v162 = vadd.f32 %v79, %v161
  %v163 = vpop.f32.mrf.mxu0
  %v164 = vadd.f32 %v79, %v163
  %165 = vmatmul.bf16.gmra.mxu0 %v97
  %v166 = vpop.f32.mrf.mxu0
  %v167 = vadd.f32 %v79, %v166
  %v168 = vpop.f32.mrf.mxu0
  %v169 = vadd.f32 %v79, %v168
  %170 = vmatmul.bf16.gmra.mxu0 %v100
  %v171 = vpop.f32.mrf.mxu0
  %v172 = vadd.f32 %v79, %v171
  %v173 = vpop.f32.mrf.mxu0
  %v174 = vadd.f32 %v79, %v173
  %175 = vmatmul.bf16.gmra.mxu0 %v103
  %v176 = vpop.f32.mrf.mxu0
  %v177 = vadd.f32 %v79, %v176
  %v178 = vpop.f32.mrf.mxu0
  %v179 = vadd.f32 %v79, %v178
  %180 = vmatmul.bf16.gmra.mxu0 %v106
  %v181 = vpop.f32.mrf.mxu0
  %v182 = vadd.f32 %v79, %v181
  %v183 = vpop.f32.mrf.mxu0
  %v184 = vadd.f32 %v79, %v183
  %185 = vmatmul.bf16.gmra.mxu0 %v109
  %v186 = vpop.f32.mrf.mxu0
  %v187 = vadd.f32 %v79, %v186
  %v188 = vpop.f32.mrf.mxu0
  %v189 = vadd.f32 %v79, %v188
  %190 = vmatmul.bf16.gmra.mxu0 %v112
  %v191 = vpop.f32.mrf.mxu0
  %v192 = vadd.f32 %v79, %v191
  %v193 = vpop.f32.mrf.mxu0
  %v194 = vadd.f32 %v79, %v193
  %195 = vmatmul.bf16.gmra.mxu0 %v115
  %v196 = vpop.f32.mrf.mxu0
  %v197 = vadd.f32 %v79, %v196
  %v198 = vpop.f32.mrf.mxu0
  %v199 = vadd.f32 %v79, %v198
  %200 = vmatmul.bf16.gmra.mxu0 %v118
  %v201 = vpop.f32.mrf.mxu0
  %v202 = vadd.f32 %v79, %v201
  %v203 = vpop.f32.mrf.mxu0
  %v204 = vadd.f32 %v79, %v203
  %205 = vmatmul.bf16.gmra.mxu0 %v121
  %v206 = vpop.f32.mrf.mxu0
  %v207 = vadd.f32 %v79, %v206
  %v208 = vpop.f32.mrf.mxu0
  %v209 = vadd.f32 %v79, %v208
  %210 = vmatmul.bf16.gmra.mxu0 %v124
  %v211 = vpop.f32.mrf.mxu0
  %v212 = vadd.f32 %v79, %v211
  %v213 = vpop.f32.mrf.mxu0
  %v214 = vadd.f32 %v79, %v213
  %215 = vmatmul.bf16.gmra.mxu0 %v127
  %v216 = vpop.f32.mrf.mxu0
  %v217 = vadd.f32 %v79, %v216
  %v218 = vpop.f32.mrf.mxu0
  %v219 = vadd.f32 %v79, %v218
  %220 = vmatmul.bf16.gmra.mxu0 %v130
  %v221 = vpop.f32.mrf.mxu0
  %v222 = vadd.f32 %v79, %v221
  %v223 = vpop.f32.mrf.mxu0
  %v224 = vadd.f32 %v79, %v223
  %225 = vmatmul.bf16.gmra.mxu0 %v133
  %v226 = vpop.f32.mrf.mxu0
  %v227 = vadd.f32 %v79, %v226
  %v228 = vpop.f32.mrf.mxu0
  %v229 = vadd.f32 %v79, %v228
  %230 = vdwg.mxu0
  %v231 = vtanh.pop %v152
  %v232 = vtanh.pop %v154
  %v233 = vtanh.pop %v157
  %v234 = vtanh.pop %v159
  %v235 = vtanh.pop %v162
  %v236 = vtanh.pop %v164
  %v237 = vtanh.pop %v167
  %v238 = vtanh.pop %v169
  %v239 = vtanh.pop %v172
  %v240 = vtanh.pop %v174
  %v241 = vtanh.pop %v177
  %v242 = vtanh.pop %v179
  %v243 = vtanh.pop %v182
  %v244 = vtanh.pop %v184
  %v245 = vtanh.pop %v187
  %v246 = vtanh.pop %v189
  %v247 = vtanh.pop %v192
  %v248 = vtanh.pop %v194
  %v249 = vtanh.pop %v197
  %v250 = vtanh.pop %v199
  %v251 = vtanh.pop %v202
  %v252 = vtanh.pop %v204
  %v253 = vtanh.pop %v207
  %v254 = vtanh.pop %v209
  %v255 = vtanh.pop %v212
  %v256 = vtanh.pop %v214
  %v257 = vtanh.pop %v217
  %v258 = vtanh.pop %v219
  %v259 = vtanh.pop %v222
  %v260 = vtanh.pop %v224
  %v261 = vtanh.pop %v227
  %v262 = vtanh.pop %v229
  %v263 = vpack.c.bf16 %v232, %v231
  %v264 = vpack.c.bf16 %v234, %v233
  %v265 = vpack.c.bf16 %v236, %v235
  %v266 = vpack.c.bf16 %v238, %v237
  %v267 = vpack.c.bf16 %v240, %v239
  %v268 = vpack.c.bf16 %v242, %v241
  %v269 = vpack.c.bf16 %v244, %v243
  %v270 = vpack.c.bf16 %v246, %v245
  %v271 = vpack.c.bf16 %v248, %v247
  %v272 = vpack.c.bf16 %v250, %v249
  %v273 = vpack.c.bf16 %v252, %v251
  %v274 = vpack.c.bf16 %v254, %v253
  %v275 = vpack.c.bf16 %v256, %v255
  %v276 = vpack.c.bf16 %v258, %v257
  %v277 = vpack.c.bf16 %v260, %v259
  %v278 = vpack.c.bf16 %v262, %v261
  %v279 = vld [vmem:[%s2] sm:$0xf]
  %v280 = vld [vmem:[%s2 + $0x4] sm:$0xf]
  %v281 = vld [vmem:[%s2 + $0x8] sm:$0xf]
  %v282 = vld [vmem:[%s2 + $0xc] sm:$0xf]
  %v283 = vld [vmem:[%s2 + $0x10] sm:$0xf]
  %v284 = vld [vmem:[%s2 + $0x14] sm:$0xf]
  %v285 = vld [vmem:[%s2 + $0x18] sm:$0xf]
  %v286 = vld [vmem:[%s2 + $0x1c] sm:$0xf]
  %v288 = vperm.slane %v25, 0
  %v298 = vunpack.c.l.b16 %v279
  %v299 = vunpack.c.l.b16 %v280
  %v300 = vunpack.c.l.b16 %v281
  %v301 = vunpack.c.l.b16 %v282
  %v302 = vunpack.c.l.b16 %v283
  %v303 = vunpack.c.l.b16 %v284
  %v304 = vunpack.c.l.b16 %v285
  %v305 = vunpack.c.l.b16 %v286
  %v306 = vpack.c.b16 %v299, %v298
  %v307 = vpack.c.b16 %v301, %v300
  %v308 = vpack.c.b16 %v303, %v302
  %v309 = vpack.c.b16 %v305, %v304
  %vm314 = vcmask 523264
  %v316 = vsel %vm314, %v263, 0
  %v319 = vsel %vm314, %v264, 0
  %v322 = vsel %vm314, %v265, 0
  %v325 = vsel %vm314, %v266, 0
  %v328 = vsel %vm314, %v267, 0
  %v331 = vsel %vm314, %v268, 0
  %v334 = vsel %vm314, %v269, 0
  %v337 = vsel %vm314, %v270, 0
  %v340 = vsel %vm314, %v271, 0
  %v343 = vsel %vm314, %v272, 0
  %v346 = vsel %vm314, %v273, 0
  %v349 = vsel %vm314, %v274, 0
  %v352 = vsel %vm314, %v275, 0
  %v355 = vsel %vm314, %v276, 0
  %v358 = vsel %vm314, %v277, 0
  %v361 = vsel %vm314, %v278, 0
  %363 = vmatpush.bf16.msra.mxu0 0
  %364 = vmatpush.bf16.msra.mxu0 0
  %365 = vmatpush.bf16.msra.mxu0 0
  %366 = vmatpush.bf16.msra.mxu0 0
  %367 = vmatpush.bf16.msra.mxu0 %v309
  %368 = vmatpush.bf16.msra.mxu0 %v308
  %369 = vmatpush.bf16.msra.mxu0 %v307
  %370 = vmatpush.bf16.msra.mxu0 %v306
  %371 = vmatmul.bf16.gmra.mxu0 %v316
  %v372 = vpop.f32.mrf.mxu0
  %v373 = vadd.f32 %v288, %v372
  %v374 = vpop.f32.mrf.mxu0
  %v375 = vadd.f32 %v288, %v374
  %376 = vmatmul.bf16.gmra.mxu0 %v319
  %v377 = vpop.f32.mrf.mxu0
  %v378 = vadd.f32 %v288, %v377
  %v379 = vpop.f32.mrf.mxu0
  %v380 = vadd.f32 %v288, %v379
  %381 = vmatmul.bf16.gmra.mxu0 %v322
  %v382 = vpop.f32.mrf.mxu0
  %v383 = vadd.f32 %v288, %v382
  %v384 = vpop.f32.mrf.mxu0
  %v385 = vadd.f32 %v288, %v384
  %386 = vmatmul.bf16.gmra.mxu0 %v325
  %v387 = vpop.f32.mrf.mxu0
  %v388 = vadd.f32 %v288, %v387
  %v389 = vpop.f32.mrf.mxu0
  %v390 = vadd.f32 %v288, %v389
  %391 = vmatmul.bf16.gmra.mxu0 %v328
  %v392 = vpop.f32.mrf.mxu0
  %v393 = vadd.f32 %v288, %v392
  %v394 = vpop.f32.mrf.mxu0
  %v395 = vadd.f32 %v288, %v394
  %396 = vmatmul.bf16.gmra.mxu0 %v331
  %v397 = vpop.f32.mrf.mxu0
  %v398 = vadd.f32 %v288, %v397
  %v399 = vpop.f32.mrf.mxu0
  %v400 = vadd.f32 %v288, %v399
  %401 = vmatmul.bf16.gmra.mxu0 %v334
  %v402 = vpop.f32.mrf.mxu0
  %v403 = vadd.f32 %v288, %v402
  %v404 = vpop.f32.mrf.mxu0
  %v405 = vadd.f32 %v288, %v404
  %406 = vmatmul.bf16.gmra.mxu0 %v337
  %v407 = vpop.f32.mrf.mxu0
  %v408 = vadd.f32 %v288, %v407
  %v409 = vpop.f32.mrf.mxu0
  %v410 = vadd.f32 %v288, %v409
  %411 = vmatmul.bf16.gmra.mxu0 %v340
  %v412 = vpop.f32.mrf.mxu0
  %v413 = vadd.f32 %v288, %v412
  %v414 = vpop.f32.mrf.mxu0
  %v415 = vadd.f32 %v288, %v414
  %416 = vmatmul.bf16.gmra.mxu0 %v343
  %v417 = vpop.f32.mrf.mxu0
  %v418 = vadd.f32 %v288, %v417
  %v419 = vpop.f32.mrf.mxu0
  %v420 = vadd.f32 %v288, %v419
  %421 = vmatmul.bf16.gmra.mxu0 %v346
  %v422 = vpop.f32.mrf.mxu0
  %v423 = vadd.f32 %v288, %v422
  %v424 = vpop.f32.mrf.mxu0
  %v425 = vadd.f32 %v288, %v424
  %426 = vmatmul.bf16.gmra.mxu0 %v349
  %v427 = vpop.f32.mrf.mxu0
  %v428 = vadd.f32 %v288, %v427
  %v429 = vpop.f32.mrf.mxu0
  %v430 = vadd.f32 %v288, %v429
  %431 = vmatmul.bf16.gmra.mxu0 %v352
  %v432 = vpop.f32.mrf.mxu0
  %v433 = vadd.f32 %v288, %v432
  %v434 = vpop.f32.mrf.mxu0
  %v435 = vadd.f32 %v288, %v434
  %436 = vmatmul.bf16.gmra.mxu0 %v355
  %v437 = vpop.f32.mrf.mxu0
  %v438 = vadd.f32 %v288, %v437
  %v439 = vpop.f32.mrf.mxu0
  %v440 = vadd.f32 %v288, %v439
  %441 = vmatmul.bf16.gmra.mxu0 %v358
  %v442 = vpop.f32.mrf.mxu0
  %v443 = vadd.f32 %v288, %v442
  %v444 = vpop.f32.mrf.mxu0
  %v445 = vadd.f32 %v288, %v444
  %446 = vmatmul.bf16.gmra.mxu0 %v361
  %v447 = vpop.f32.mrf.mxu0
  %v448 = vadd.f32 %v288, %v447
  %v449 = vpop.f32.mrf.mxu0
  %v450 = vadd.f32 %v288, %v449
  %451 = vdwg.mxu0
  %v452 = vtanh.pop %v373
  %v453 = vtanh.pop %v375
  %v454 = vtanh.pop %v378
  %v455 = vtanh.pop %v380
  %v456 = vtanh.pop %v383
  %v457 = vtanh.pop %v385
  %v458 = vtanh.pop %v388
  %v459 = vtanh.pop %v390
  %v460 = vtanh.pop %v393
  %v461 = vtanh.pop %v395
  %v462 = vtanh.pop %v398
  %v463 = vtanh.pop %v400
  %v464 = vtanh.pop %v403
  %v465 = vtanh.pop %v405
  %v466 = vtanh.pop %v408
  %v467 = vtanh.pop %v410
  %v468 = vtanh.pop %v413
  %v469 = vtanh.pop %v415
  %v470 = vtanh.pop %v418
  %v471 = vtanh.pop %v420
  %v472 = vtanh.pop %v423
  %v473 = vtanh.pop %v425
  %v474 = vtanh.pop %v428
  %v475 = vtanh.pop %v430
  %v476 = vtanh.pop %v433
  %v477 = vtanh.pop %v435
  %v478 = vtanh.pop %v438
  %v479 = vtanh.pop %v440
  %v480 = vtanh.pop %v443
  %v481 = vtanh.pop %v445
  %v482 = vtanh.pop %v448
  %v483 = vtanh.pop %v450
  %v484 = vpack.c.bf16 %v453, %v452
  %v485 = vpack.c.bf16 %v455, %v454
  %v486 = vpack.c.bf16 %v457, %v456
  %v487 = vpack.c.bf16 %v459, %v458
  %v488 = vpack.c.bf16 %v461, %v460
  %v489 = vpack.c.bf16 %v463, %v462
  %v490 = vpack.c.bf16 %v465, %v464
  %v491 = vpack.c.bf16 %v467, %v466
  %v492 = vpack.c.bf16 %v469, %v468
  %v493 = vpack.c.bf16 %v471, %v470
  %v494 = vpack.c.bf16 %v473, %v472
  %v495 = vpack.c.bf16 %v475, %v474
  %v496 = vpack.c.bf16 %v477, %v476
  %v497 = vpack.c.bf16 %v479, %v478
  %v498 = vpack.c.bf16 %v481, %v480
  %v499 = vpack.c.bf16 %v483, %v482
  %v500 = vld [vmem:[%s3] sm:$0xf]
  %v501 = vld [vmem:[%s3 + $0x4] sm:$0xf]
  %v502 = vld [vmem:[%s3 + $0x8] sm:$0xf]
  %v503 = vld [vmem:[%s3 + $0xc] sm:$0xf]
  %v504 = vld [vmem:[%s3 + $0x10] sm:$0xf]
  %v505 = vld [vmem:[%s3 + $0x14] sm:$0xf]
  %v506 = vld [vmem:[%s3 + $0x18] sm:$0xf]
  %v507 = vld [vmem:[%s3 + $0x1c] sm:$0xf]
  %v509 = vperm.slane %v26, 0
  %v519 = vunpack.c.l.b16 %v500
  %v520 = vunpack.c.l.b16 %v501
  %v521 = vunpack.c.l.b16 %v502
  %v522 = vunpack.c.l.b16 %v503
  %v523 = vunpack.c.l.b16 %v504
  %v524 = vunpack.c.l.b16 %v505
  %v525 = vunpack.c.l.b16 %v506
  %v526 = vunpack.c.l.b16 %v507
  %v527 = vpack.c.b16 %v520, %v519
  %v528 = vpack.c.b16 %v522, %v521
  %v529 = vpack.c.b16 %v524, %v523
  %v530 = vpack.c.b16 %v526, %v525
  %v536 = vsel %vm314, %v484, 0
  %v539 = vsel %vm314, %v485, 0
  %v542 = vsel %vm314, %v486, 0
  %v545 = vsel %vm314, %v487, 0
  %v548 = vsel %vm314, %v488, 0
  %v551 = vsel %vm314, %v489, 0
  %v554 = vsel %vm314, %v490, 0
  %v557 = vsel %vm314, %v491, 0
  %v560 = vsel %vm314, %v492, 0
  %v563 = vsel %vm314, %v493, 0
  %v566 = vsel %vm314, %v494, 0
  %v569 = vsel %vm314, %v495, 0
  %v572 = vsel %vm314, %v496, 0
  %v575 = vsel %vm314, %v497, 0
  %v578 = vsel %vm314, %v498, 0
  %v581 = vsel %vm314, %v499, 0
  %583 = vmatpush.bf16.msra.mxu0 0
  %584 = vmatpush.bf16.msra.mxu0 0
  %585 = vmatpush.bf16.msra.mxu0 0
  %586 = vmatpush.bf16.msra.mxu0 0
  %587 = vmatpush.bf16.msra.mxu0 %v530
  %588 = vmatpush.bf16.msra.mxu0 %v529
  %589 = vmatpush.bf16.msra.mxu0 %v528
  %590 = vmatpush.bf16.msra.mxu0 %v527
  %591 = vmatmul.bf16.gmra.mxu0 %v536
  %v592 = vpop.f32.mrf.mxu0
  %v593 = vadd.f32 %v509, %v592
  %v594 = vpop.f32.mrf.mxu0
  %v595 = vadd.f32 %v509, %v594
  %596 = vmatmul.bf16.gmra.mxu0 %v539
  %v597 = vpop.f32.mrf.mxu0
  %v598 = vadd.f32 %v509, %v597
  %v599 = vpop.f32.mrf.mxu0
  %v600 = vadd.f32 %v509, %v599
  %601 = vmatmul.bf16.gmra.mxu0 %v542
  %v602 = vpop.f32.mrf.mxu0
  %v603 = vadd.f32 %v509, %v602
  %v604 = vpop.f32.mrf.mxu0
  %v605 = vadd.f32 %v509, %v604
  %606 = vmatmul.bf16.gmra.mxu0 %v545
  %v607 = vpop.f32.mrf.mxu0
  %v608 = vadd.f32 %v509, %v607
  %v609 = vpop.f32.mrf.mxu0
  %v610 = vadd.f32 %v509, %v609
  %611 = vmatmul.bf16.gmra.mxu0 %v548
  %v612 = vpop.f32.mrf.mxu0
  %v613 = vadd.f32 %v509, %v612
  %v614 = vpop.f32.mrf.mxu0
  %v615 = vadd.f32 %v509, %v614
  %616 = vmatmul.bf16.gmra.mxu0 %v551
  %v617 = vpop.f32.mrf.mxu0
  %v618 = vadd.f32 %v509, %v617
  %v619 = vpop.f32.mrf.mxu0
  %v620 = vadd.f32 %v509, %v619
  %621 = vmatmul.bf16.gmra.mxu0 %v554
  %v622 = vpop.f32.mrf.mxu0
  %v623 = vadd.f32 %v509, %v622
  %v624 = vpop.f32.mrf.mxu0
  %v625 = vadd.f32 %v509, %v624
  %626 = vmatmul.bf16.gmra.mxu0 %v557
  %v627 = vpop.f32.mrf.mxu0
  %v628 = vadd.f32 %v509, %v627
  %v629 = vpop.f32.mrf.mxu0
  %v630 = vadd.f32 %v509, %v629
  %631 = vmatmul.bf16.gmra.mxu0 %v560
  %v632 = vpop.f32.mrf.mxu0
  %v633 = vadd.f32 %v509, %v632
  %v634 = vpop.f32.mrf.mxu0
  %v635 = vadd.f32 %v509, %v634
  %636 = vmatmul.bf16.gmra.mxu0 %v563
  %v637 = vpop.f32.mrf.mxu0
  %v638 = vadd.f32 %v509, %v637
  %v639 = vpop.f32.mrf.mxu0
  %v640 = vadd.f32 %v509, %v639
  %641 = vmatmul.bf16.gmra.mxu0 %v566
  %v642 = vpop.f32.mrf.mxu0
  %v643 = vadd.f32 %v509, %v642
  %v644 = vpop.f32.mrf.mxu0
  %v645 = vadd.f32 %v509, %v644
  %646 = vmatmul.bf16.gmra.mxu0 %v569
  %v647 = vpop.f32.mrf.mxu0
  %v648 = vadd.f32 %v509, %v647
  %v649 = vpop.f32.mrf.mxu0
  %v650 = vadd.f32 %v509, %v649
  %651 = vmatmul.bf16.gmra.mxu0 %v572
  %v652 = vpop.f32.mrf.mxu0
  %v653 = vadd.f32 %v509, %v652
  %v654 = vpop.f32.mrf.mxu0
  %v655 = vadd.f32 %v509, %v654
  %656 = vmatmul.bf16.gmra.mxu0 %v575
  %v657 = vpop.f32.mrf.mxu0
  %v658 = vadd.f32 %v509, %v657
  %v659 = vpop.f32.mrf.mxu0
  %v660 = vadd.f32 %v509, %v659
  %661 = vmatmul.bf16.gmra.mxu0 %v578
  %v662 = vpop.f32.mrf.mxu0
  %v663 = vadd.f32 %v509, %v662
  %v664 = vpop.f32.mrf.mxu0
  %v665 = vadd.f32 %v509, %v664
  %666 = vmatmul.bf16.gmra.mxu0 %v581
  %v667 = vpop.f32.mrf.mxu0
  %v668 = vadd.f32 %v509, %v667
  %v669 = vpop.f32.mrf.mxu0
  %v670 = vadd.f32 %v509, %v669
  %671 = vdwg.mxu0
  %v672 = vtanh.pop %v593
  %v673 = vtanh.pop %v595
  %v674 = vtanh.pop %v598
  %v675 = vtanh.pop %v600
  %v676 = vtanh.pop %v603
  %v677 = vtanh.pop %v605
  %v678 = vtanh.pop %v608
  %v679 = vtanh.pop %v610
  %v680 = vtanh.pop %v613
  %v681 = vtanh.pop %v615
  %v682 = vtanh.pop %v618
  %v683 = vtanh.pop %v620
  %v684 = vtanh.pop %v623
  %v685 = vtanh.pop %v625
  %v686 = vtanh.pop %v628
  %v687 = vtanh.pop %v630
  %v688 = vtanh.pop %v633
  %v689 = vtanh.pop %v635
  %v690 = vtanh.pop %v638
  %v691 = vtanh.pop %v640
  %v692 = vtanh.pop %v643
  %v693 = vtanh.pop %v645
  %v694 = vtanh.pop %v648
  %v695 = vtanh.pop %v650
  %v696 = vtanh.pop %v653
  %v697 = vtanh.pop %v655
  %v698 = vtanh.pop %v658
  %v699 = vtanh.pop %v660
  %v700 = vtanh.pop %v663
  %v701 = vtanh.pop %v665
  %v702 = vtanh.pop %v668
  %v703 = vtanh.pop %v670
  %v704 = vpack.c.bf16 %v673, %v672
  %v705 = vpack.c.bf16 %v675, %v674
  %v706 = vpack.c.bf16 %v677, %v676
  %v707 = vpack.c.bf16 %v679, %v678
  %v708 = vpack.c.bf16 %v681, %v680
  %v709 = vpack.c.bf16 %v683, %v682
  %v710 = vpack.c.bf16 %v685, %v684
  %v711 = vpack.c.bf16 %v687, %v686
  %v712 = vpack.c.bf16 %v689, %v688
  %v713 = vpack.c.bf16 %v691, %v690
  %v714 = vpack.c.bf16 %v693, %v692
  %v715 = vpack.c.bf16 %v695, %v694
  %v716 = vpack.c.bf16 %v697, %v696
  %v717 = vpack.c.bf16 %v699, %v698
  %v718 = vpack.c.bf16 %v701, %v700
  %v719 = vpack.c.bf16 %v703, %v702
  %v720 = vld [vmem:[%s4] sm:$0xf]
  %v721 = vld [vmem:[%s4 + $0x4] sm:$0xf]
  %v722 = vld [vmem:[%s4 + $0x8] sm:$0xf]
  %v723 = vld [vmem:[%s4 + $0xc] sm:$0xf]
  %v724 = vld [vmem:[%s4 + $0x10] sm:$0xf]
  %v725 = vld [vmem:[%s4 + $0x14] sm:$0xf]
  %v726 = vld [vmem:[%s4 + $0x18] sm:$0xf]
  %v727 = vld [vmem:[%s4 + $0x1c] sm:$0xf]
  %v729 = vperm.slane %v27, 0
  %v739 = vunpack.c.l.b16 %v720
  %v740 = vunpack.c.l.b16 %v721
  %v741 = vunpack.c.l.b16 %v722
  %v742 = vunpack.c.l.b16 %v723
  %v743 = vunpack.c.l.b16 %v724
  %v744 = vunpack.c.l.b16 %v725
  %v745 = vunpack.c.l.b16 %v726
  %v746 = vunpack.c.l.b16 %v727
  %v747 = vpack.c.b16 %v740, %v739
  %v748 = vpack.c.b16 %v742, %v741
  %v749 = vpack.c.b16 %v744, %v743
  %v750 = vpack.c.b16 %v746, %v745
  %v756 = vsel %vm314, %v704, 0
  %v759 = vsel %vm314, %v705, 0
  %v762 = vsel %vm314, %v706, 0
  %v765 = vsel %vm314, %v707, 0
  %v768 = vsel %vm314, %v708, 0
  %v771 = vsel %vm314, %v709, 0
  %v774 = vsel %vm314, %v710, 0
  %v777 = vsel %vm314, %v711, 0
  %v780 = vsel %vm314, %v712, 0
  %v783 = vsel %vm314, %v713, 0
  %v786 = vsel %vm314, %v714, 0
  %v789 = vsel %vm314, %v715, 0
  %v792 = vsel %vm314, %v716, 0
  %v795 = vsel %vm314, %v717, 0
  %v798 = vsel %vm314, %v718, 0
  %v801 = vsel %vm314, %v719, 0
  %803 = vmatpush.bf16.msra.mxu0 0
  %804 = vmatpush.bf16.msra.mxu0 0
  %805 = vmatpush.bf16.msra.mxu0 0
  %806 = vmatpush.bf16.msra.mxu0 0
  %807 = vmatpush.bf16.msra.mxu0 %v750
  %808 = vmatpush.bf16.msra.mxu0 %v749
  %809 = vmatpush.bf16.msra.mxu0 %v748
  %810 = vmatpush.bf16.msra.mxu0 %v747
  %811 = vmatmul.bf16.gmra.mxu0 %v756
  %v812 = vpop.f32.mrf.mxu0
  %v813 = vadd.f32 %v729, %v812
  %v814 = vpop.f32.mrf.mxu0
  %v815 = vadd.f32 %v729, %v814
  %816 = vmatmul.bf16.gmra.mxu0 %v759
  %v817 = vpop.f32.mrf.mxu0
  %v818 = vadd.f32 %v729, %v817
  %v819 = vpop.f32.mrf.mxu0
  %v820 = vadd.f32 %v729, %v819
  %821 = vmatmul.bf16.gmra.mxu0 %v762
  %v822 = vpop.f32.mrf.mxu0
  %v823 = vadd.f32 %v729, %v822
  %v824 = vpop.f32.mrf.mxu0
  %v825 = vadd.f32 %v729, %v824
  %826 = vmatmul.bf16.gmra.mxu0 %v765
  %v827 = vpop.f32.mrf.mxu0
  %v828 = vadd.f32 %v729, %v827
  %v829 = vpop.f32.mrf.mxu0
  %v830 = vadd.f32 %v729, %v829
  %831 = vmatmul.bf16.gmra.mxu0 %v768
  %v832 = vpop.f32.mrf.mxu0
  %v833 = vadd.f32 %v729, %v832
  %v834 = vpop.f32.mrf.mxu0
  %v835 = vadd.f32 %v729, %v834
  %836 = vmatmul.bf16.gmra.mxu0 %v771
  %v837 = vpop.f32.mrf.mxu0
  %v838 = vadd.f32 %v729, %v837
  %v839 = vpop.f32.mrf.mxu0
  %v840 = vadd.f32 %v729, %v839
  %841 = vmatmul.bf16.gmra.mxu0 %v774
  %v842 = vpop.f32.mrf.mxu0
  %v843 = vadd.f32 %v729, %v842
  %v844 = vpop.f32.mrf.mxu0
  %v845 = vadd.f32 %v729, %v844
  %846 = vmatmul.bf16.gmra.mxu0 %v777
  %v847 = vpop.f32.mrf.mxu0
  %v848 = vadd.f32 %v729, %v847
  %v849 = vpop.f32.mrf.mxu0
  %v850 = vadd.f32 %v729, %v849
  %851 = vmatmul.bf16.gmra.mxu0 %v780
  %v852 = vpop.f32.mrf.mxu0
  %v853 = vadd.f32 %v729, %v852
  %v854 = vpop.f32.mrf.mxu0
  %v855 = vadd.f32 %v729, %v854
  %856 = vmatmul.bf16.gmra.mxu0 %v783
  %v857 = vpop.f32.mrf.mxu0
  %v858 = vadd.f32 %v729, %v857
  %v859 = vpop.f32.mrf.mxu0
  %v860 = vadd.f32 %v729, %v859
  %861 = vmatmul.bf16.gmra.mxu0 %v786
  %v862 = vpop.f32.mrf.mxu0
  %v863 = vadd.f32 %v729, %v862
  %v864 = vpop.f32.mrf.mxu0
  %v865 = vadd.f32 %v729, %v864
  %866 = vmatmul.bf16.gmra.mxu0 %v789
  %v867 = vpop.f32.mrf.mxu0
  %v868 = vadd.f32 %v729, %v867
  %v869 = vpop.f32.mrf.mxu0
  %v870 = vadd.f32 %v729, %v869
  %871 = vmatmul.bf16.gmra.mxu0 %v792
  %v872 = vpop.f32.mrf.mxu0
  %v873 = vadd.f32 %v729, %v872
  %v874 = vpop.f32.mrf.mxu0
  %v875 = vadd.f32 %v729, %v874
  %876 = vmatmul.bf16.gmra.mxu0 %v795
  %v877 = vpop.f32.mrf.mxu0
  %v878 = vadd.f32 %v729, %v877
  %v879 = vpop.f32.mrf.mxu0
  %v880 = vadd.f32 %v729, %v879
  %881 = vmatmul.bf16.gmra.mxu0 %v798
  %v882 = vpop.f32.mrf.mxu0
  %v883 = vadd.f32 %v729, %v882
  %v884 = vpop.f32.mrf.mxu0
  %v885 = vadd.f32 %v729, %v884
  %886 = vmatmul.bf16.gmra.mxu0 %v801
  %v887 = vpop.f32.mrf.mxu0
  %v888 = vadd.f32 %v729, %v887
  %v889 = vpop.f32.mrf.mxu0
  %v890 = vadd.f32 %v729, %v889
  %891 = vdwg.mxu0
  %vm892 = vcmask 80896
  %893 = vst.msk [vmem:[%s6] sm:$0xff] %vm892, %v813
  %894 = vst.msk [vmem:[%s6 + $0x8] sm:$0xff] %vm892, %v815
  %895 = vst.msk [vmem:[%s6 + $0x10] sm:$0xff] %vm892, %v818
  %896 = vst.msk [vmem:[%s6 + $0x18] sm:$0xff] %vm892, %v820
  %897 = vst.msk [vmem:[%s6 + $0x20] sm:$0xff] %vm892, %v823
  %898 = vst.msk [vmem:[%s6 + $0x28] sm:$0xff] %vm892, %v825
  %899 = vst.msk [vmem:[%s6 + $0x30] sm:$0xff] %vm892, %v828
  %900 = vst.msk [vmem:[%s6 + $0x38] sm:$0xff] %vm892, %v830
  %901 = vst.msk [vmem:[%s6 + $0x40] sm:$0xff] %vm892, %v833
  %902 = vst.msk [vmem:[%s6 + $0x48] sm:$0xff] %vm892, %v835
  %903 = vst.msk [vmem:[%s6 + $0x50] sm:$0xff] %vm892, %v838
  %904 = vst.msk [vmem:[%s6 + $0x58] sm:$0xff] %vm892, %v840
  %905 = vst.msk [vmem:[%s6 + $0x60] sm:$0xff] %vm892, %v843
  %906 = vst.msk [vmem:[%s6 + $0x68] sm:$0xff] %vm892, %v845
  %907 = vst.msk [vmem:[%s6 + $0x70] sm:$0xff] %vm892, %v848
  %908 = vst.msk [vmem:[%s6 + $0x78] sm:$0xff] %vm892, %v850
  %909 = vst.msk [vmem:[%s6 + $0x80] sm:$0xff] %vm892, %v853
  %910 = vst.msk [vmem:[%s6 + $0x88] sm:$0xff] %vm892, %v855
  %911 = vst.msk [vmem:[%s6 + $0x90] sm:$0xff] %vm892, %v858
  %912 = vst.msk [vmem:[%s6 + $0x98] sm:$0xff] %vm892, %v860
  %913 = vst.msk [vmem:[%s6 + $0xa0] sm:$0xff] %vm892, %v863
  %914 = vst.msk [vmem:[%s6 + $0xa8] sm:$0xff] %vm892, %v865
  %915 = vst.msk [vmem:[%s6 + $0xb0] sm:$0xff] %vm892, %v868
  %916 = vst.msk [vmem:[%s6 + $0xb8] sm:$0xff] %vm892, %v870
  %917 = vst.msk [vmem:[%s6 + $0xc0] sm:$0xff] %vm892, %v873
  %918 = vst.msk [vmem:[%s6 + $0xc8] sm:$0xff] %vm892, %v875
  %919 = vst.msk [vmem:[%s6 + $0xd0] sm:$0xff] %vm892, %v878
  %920 = vst.msk [vmem:[%s6 + $0xd8] sm:$0xff] %vm892, %v880
  %921 = vst.msk [vmem:[%s6 + $0xe0] sm:$0xff] %vm892, %v883
  %922 = vst.msk [vmem:[%s6 + $0xe8] sm:$0xff] %vm892, %v885
  %923 = vst.msk [vmem:[%s6 + $0xf0] sm:$0xff] %vm892, %v888
  %924 = vst.msk [vmem:[%s6 + $0xf8] sm:$0xff] %vm892, %v890
  // Predicated region
  $region26: #{tpu_custom_call.1} parent=0 // pred_check
    _
  $region27: #{tpu_custom_call.1} parent=0 // pred_check_branch
    %926 = sbr.rel (0) target = $region29
  $region28: #{tpu_custom_call.1} parent=0 // pred_region
    _
  $region29: #{tpu_custom_call.1} parent=0 // pred_fallthru
    _
  // Predicated region
  $region30: #{tpu_custom_call.1} parent=0 // pred_check
    _
  $region31: #{tpu_custom_call.1} parent=0 // pred_check_branch
    %928 = sbr.rel (0) target = $region33
  $region32: #{tpu_custom_call.1} parent=0 // pred_region
    _
  $region33: #{tpu_custom_call.1} parent=0 // pred_fallthru
    _

</llo_original>
